<compile_context>
chip_gen: v7x
topology: tpu7x:2x2x1
jax: 0.10.0
libtpu: 0.0.40
codegen_flags: <defaults>
</compile_context>

<pallas_src>
import functools
import math

import jax
import jax.numpy as jnp
from jax import lax
from jax.experimental import pallas as pl
from jax.experimental.pallas import tpu as pltpu


def _layernorm(x, gamma, beta, eps):
    # Keep LayerNorm statistics in f32; cast to bf16 only at MXU operand boundaries.
    mean = jnp.mean(x, axis=-1, keepdims=True)
    var = jnp.mean(jnp.square(x - mean), axis=-1, keepdims=True)
    return (x - mean) * lax.rsqrt(var + eps) * gamma + beta


def _gelu(x):
    # GPT-2 tanh-approximation gelu (tanh goes to the EUP).
    c = math.sqrt(2.0 / math.pi)
    return 0.5 * x * (1.0 + jnp.tanh(c * (x + 0.044715 * x * x * x)))


# --------------------------------------------------------------------------------------
# Stage 1: LN1 + QKV projection -> head-major (B, nh, S, hs) bf16 tensors.
# --------------------------------------------------------------------------------------
def _qkv_kernel(x_ref, ln1_g_ref, ln1_b_ref, w_attn_ref, b_attn_ref,
                q_ref, k_ref, v_ref, *, num_heads, eps):
    H = x_ref.shape[-1]
    hs = H // num_heads

    x = x_ref[0]                                                        # (ts, H) f32
    h1 = _layernorm(x, ln1_g_ref[0], ln1_b_ref[0], eps)
    # bf16 operands on the MXU, f32 accumulation.  The 1/sqrt(head_size) scale is already
    # folded into the Q columns of w_attn / b_attn on the host.
    qkv = jnp.dot(h1.astype(jnp.bfloat16), w_attn_ref[...],
                  preferred_element_type=jnp.float32) + b_attn_ref[0]   # (ts, 3H) f32

    for h in range(num_heads):            # static slicing into the head-major layout (no concat)
        q_ref[0, h] = qkv[:, h * hs:(h + 1) * hs].astype(jnp.bfloat16)
        k_ref[0, h] = qkv[:, H + h * hs:H + (h + 1) * hs].astype(jnp.bfloat16)
        v_ref[0, h] = qkv[:, 2 * H + h * hs:2 * H + (h + 1) * hs].astype(jnp.bfloat16)


# --------------------------------------------------------------------------------------
# Stage 2: flash-style causal attention + c_proj + residual + LN2 + MLP + residual.
# Grid = (batch, query tile, key tile); the key-tile axis is the innermost "arbitrary" reduction.
# --------------------------------------------------------------------------------------
def _attn_mlp_kernel(x_ref, q_ref, k_ref, v_ref,
                     w_projh_ref, b_proj_ref,
                     ln2_g_ref, ln2_b_ref,
                     w_fc1_ref, b_fc1_ref,
                     w_fc2_ref, b_fc2_ref,
                     o_ref,
                     m_sc, l_sc, acc_sc,
                     *, eps):
    iq = pl.program_id(1)
    ik = pl.program_id(2)
    nh, tq, hs = q_ref.shape[1], q_ref.shape[2], q_ref.shape[3]
    tk = k_ref.shape[2]
    H = o_ref.shape[-1]

    @pl.when(ik == 0)
    def _init():
        m_sc[...] = jnp.full(m_sc.shape, -jnp.inf, m_sc.dtype)
        l_sc[...] = jnp.zeros(l_sc.shape, l_sc.dtype)
        acc_sc[...] = jnp.zeros(acc_sc.shape, acc_sc.dtype)

    # With tq == tk, key tiles strictly after the query tile are fully masked -> skip the work.
    @pl.when(ik <= iq)
    def _update():
        q = q_ref[0]                                        # (nh, tq, hs) bf16, pre-scaled
        k = k_ref[0]                                        # (nh, tk, hs) bf16
        v = v_ref[0]                                        # (nh, tk, hs) bf16

        # Heads batched on the MXU; contract the last dims directly (no explicit k transpose).
        s = lax.dot_general(q, k, (((2,), (2,)), ((0,), (0,))),
                            preferred_element_type=jnp.float32)          # (nh, tq, tk) f32

        # Tile-local causal mask built from the grid offsets (query index t, key index f).
        row = iq * tq + lax.broadcasted_iota(jnp.int32, (nh, tq, tk), 1)
        col = ik * tk + lax.broadcasted_iota(jnp.int32, (nh, tq, tk), 2)
        s = jnp.where(col <= row, s, jnp.float32(-10000.0))  # masked_bias like the reference

        # Online softmax (normalization deferred to the epilogue).
        m_prev = m_sc[...]
        m_new = jnp.maximum(m_prev, jnp.max(s, axis=-1, keepdims=True))
        alpha = jnp.exp(m_prev - m_new)
        p = jnp.exp(s - m_new)                              # (nh, tq, tk) f32
        l_sc[...] = alpha * l_sc[...] + jnp.sum(p, axis=-1, keepdims=True)
        pv = lax.dot_general(p.astype(v.dtype), v, (((2,), (1,)), ((0,), (0,))),
                             preferred_element_type=jnp.float32)          # (nh, tq, hs)
        acc_sc[...] = alpha * acc_sc[...] + pv
        m_sc[...] = m_new

    @pl.when(ik == pl.num_programs(2) - 1)
    def _epilogue():
        inv_l = pl.reciprocal(l_sc[...], approx=True)       # EUP reciprocal, not a VPU divide
        ctx = acc_sc[...] * inv_l                           # (nh, tq, hs) f32

        # c_proj: accumulate per-head (tq, hs) @ (hs, H) partial products directly into a
        # (tq, H) slab — avoids any head transpose / reshape / concatenate relayout.
        attn_out = jnp.zeros((tq, H), jnp.float32)
        for h in range(nh):
            attn_out = attn_out + jnp.dot(ctx[h].astype(jnp.bfloat16), w_projh_ref[h],
                                          preferred_element_type=jnp.float32)
        attn_out = attn_out + b_proj_ref[0]

        x = x_ref[0]                                        # (tq, H) f32
        x1 = x + attn_out                                   # first residual

        h2 = _layernorm(x1, ln2_g_ref[0], ln2_b_ref[0], eps)
        ff = jnp.dot(h2.astype(jnp.bfloat16), w_fc1_ref[...],
                     preferred_element_type=jnp.float32) + b_fc1_ref[0]   # (tq, 4H)
        ff = _gelu(ff)
        mlp = jnp.dot(ff.astype(jnp.bfloat16), w_fc2_ref[...],
                      preferred_element_type=jnp.float32) + b_fc2_ref[0]  # (tq, H)

        o_ref[0] = (x1 + mlp).astype(o_ref.dtype)           # second residual


# --------------------------------------------------------------------------------------
# Host wrapper
# --------------------------------------------------------------------------------------
def gpt2_layer(x, params, *, num_heads, eps, seq_tile=None):
    B, S, H = x.shape
    assert H % num_heads == 0
    hs = H // num_heads
    if seq_tile is None:
        seq_tile = min(S, 256)
    assert S % seq_tile == 0
    ts = seq_tile
    n_s = S // ts

    f32, bf16 = jnp.float32, jnp.bfloat16

    # Fold the 1/sqrt(head_size) attention scale into the Q columns of the QKV projection
    # (free at trace time — removes an O(S^2) scale multiply from the kernel).
    scale = 1.0 / math.sqrt(hs)
    col_scale = jnp.concatenate([jnp.full((H,), scale, f32), jnp.ones((2 * H,), f32)])
    w_attn = (params["w_attn"].astype(f32) * col_scale).astype(bf16)
    b_attn = params["b_attn"].astype(f32) * col_scale[None, :]

    # Weights are bf16 MXU operands (f32 accumulation in-kernel); biases / LN params stay f32.
    w_projh = params["w_proj"].astype(bf16).reshape(num_heads, hs, H)   # per-head row blocks
    w_fc1 = params["w_fc1"].astype(bf16)
    w_fc2 = params["w_fc2"].astype(bf16)
    ln1_g = params["ln1_g"].astype(f32)
    ln1_b = params["ln1_b"].astype(f32)
    ln2_g = params["ln2_g"].astype(f32)
    ln2_b = params["ln2_b"].astype(f32)
    b_proj = params["b_proj"].astype(f32)
    b_fc1 = params["b_fc1"].astype(f32)
    b_fc2 = params["b_fc2"].astype(f32)

    # TODO(synk): at real GPT-2 sizes mark these grid-invariant weights pipeline_mode=pl.Buffered(1)
    # (or stage them once via memory_space=pl.ANY) to avoid double-buffered weight copies in VMEM.
    def const1(shape):  # invariant operand for the stage-1 grid (b, i)
        z = (0,) * len(shape)
        return pl.BlockSpec(shape, lambda b, i, _z=z: _z)

    def const2(shape):  # invariant operand for the stage-2 grid (b, i, j)
        z = (0,) * len(shape)
        return pl.BlockSpec(shape, lambda b, i, j, _z=z: _z)

    # ---------------- stage 1: LN1 + QKV projection ----------------
    qkv_out = jax.ShapeDtypeStruct((B, num_heads, S, hs), bf16)
    stage1 = pl.pallas_call(
        functools.partial(_qkv_kernel, num_heads=num_heads, eps=eps),
        grid=(B, n_s),
        in_specs=[
            pl.BlockSpec((1, ts, H), lambda b, i: (b, i, 0)),
            const1((1, H)), const1((1, H)),
            const1((H, 3 * H)), const1((1, 3 * H)),
        ],
        out_specs=[
            pl.BlockSpec((1, num_heads, ts, hs), lambda b, i: (b, 0, i, 0)),
            pl.BlockSpec((1, num_heads, ts, hs), lambda b, i: (b, 0, i, 0)),
            pl.BlockSpec((1, num_heads, ts, hs), lambda b, i: (b, 0, i, 0)),
        ],
        out_shape=[qkv_out, qkv_out, qkv_out],
        compiler_params=pltpu.CompilerParams(
            dimension_semantics=("parallel", "parallel"),
            vmem_limit_bytes=48 * 1024 * 1024),
        cost_estimate=pl.CostEstimate(
            flops=int(2 * B * S * H * 3 * H),
            transcendentals=int(B * S),
            bytes_accessed=int(B * S * H * 4 + H * 3 * H * 2 + 3 * B * S * H * 2)),
    )
    q, k, v = stage1(x, ln1_g, ln1_b, w_attn, b_attn)

    # ---------------- stage 2: flash attention + c_proj + residuals + LN2 + MLP ----------------
    tq = tk = ts
    n_q = S // tq
    n_kv = S // tk
    attn_flops = 4 * B * num_heads * S * S * hs + 2 * B * S * H * H
    mlp_flops = 16 * B * S * H * H
    weight_bytes = 2 * (H * H + 2 * H * 4 * H)
    stage2 = pl.pallas_call(
        functools.partial(_attn_mlp_kernel, eps=eps),
        grid=(B, n_q, n_kv),
        in_specs=[
            pl.BlockSpec((1, tq, H), lambda b, i, j: (b, i, 0)),                  # x (residual)
            pl.BlockSpec((1, num_heads, tq, hs), lambda b, i, j: (b, 0, i, 0)),   # q
            pl.BlockSpec((1, num_heads, tk, hs), lambda b, i, j: (b, 0, j, 0)),   # k
            pl.BlockSpec((1, num_heads, tk, hs), lambda b, i, j: (b, 0, j, 0)),   # v
            const2((num_heads, hs, H)),                                           # w_proj per-head
            const2((1, H)),                                                       # b_proj
            const2((1, H)), const2((1, H)),                                       # ln2 gamma/beta
            const2((H, 4 * H)), const2((1, 4 * H)),                               # fc1
            const2((4 * H, H)), const2((1, H)),                                   # fc2
        ],
        out_specs=pl.BlockSpec((1, tq, H), lambda b, i, j: (b, i, 0)),
        out_shape=jax.ShapeDtypeStruct((B, S, H), x.dtype),
        scratch_shapes=[
            pltpu.VMEM((num_heads, tq, 1), jnp.float32),     # running max
            pltpu.VMEM((num_heads, tq, 1), jnp.float32),     # running softmax denom
            pltpu.VMEM((num_heads, tq, hs), jnp.float32),    # output accumulator
        ],
        compiler_params=pltpu.CompilerParams(
            dimension_semantics=("parallel", "parallel", "arbitrary"),
            vmem_limit_bytes=48 * 1024 * 1024),
        cost_estimate=pl.CostEstimate(
            flops=int(attn_flops + mlp_flops),
            transcendentals=int(B * num_heads * S * S + 4 * B * S * H),
            bytes_accessed=int(2 * B * S * H * 4 + 3 * B * S * H * 2 + weight_bytes)),
    )
    return stage2(x, q, k, v, w_projh, b_proj, ln2_g, ln2_b,
                  w_fc1, b_fc1, w_fc2, b_fc2)


# --------------------------------------------------------------------------------------
# Pure-JAX reference (mirrors the PyTorch forward, f32 everywhere)
# --------------------------------------------------------------------------------------
def gpt2_layer_reference(x, params, *, num_heads, eps):
    B, S, H = x.shape
    hs = H // num_heads

    def ln(z, g, b):
        m = jnp.mean(z, -1, keepdims=True)
        v = jnp.mean((z - m) ** 2, -1, keepdims=True)
        return (z - m) / jnp.sqrt(v + eps) * g[0] + b[0]

    h1 = ln(x, params["ln1_g"], params["ln1_b"])
    cattn = h1 @ params["w_attn"] + params["b_attn"][0]
    q, k, v = jnp.split(cattn, 3, axis=-1)
    q = q.reshape(B, S, num_heads, hs).transpose(0, 2, 1, 3)
    k = k.reshape(B, S, num_heads, hs).transpose(0, 2, 1, 3)
    v = v.reshape(B, S, num_heads, hs).transpose(0, 2, 1, 3)
    raw = jnp.einsum('bhtc,bhfc->bhft', q, k) / math.sqrt(hs)
    mask = (jnp.arange(S)[None, :] >= jnp.arange(S)[:, None])[None, None]  # [f, t]: t >= f
    raw = jnp.where(mask, raw, jnp.float32(-10000.0))
    attn = jax.nn.softmax(raw, axis=-2)
    ctx = jnp.einsum('bhft,bhfc->bhtc', attn, v)
    ctx = ctx.transpose(0, 2, 1, 3).reshape(B, S, H)
    attn_out = ctx @ params["w_proj"] + params["b_proj"][0]
    x1 = x + attn_out
    h2 = ln(x1, params["ln2_g"], params["ln2_b"])
    ff = _gelu(h2 @ params["w_fc1"] + params["b_fc1"][0])
    mlp = ff @ params["w_fc2"] + params["b_fc2"][0]
    return x1 + mlp


def make_params(key, hidden):
    ks = jax.random.split(key, 12)
    n = lambda k, shape, s=0.02: (s * jax.random.normal(k, shape)).astype(jnp.float32)
    return {
        "ln1_g": 1.0 + n(ks[0], (1, hidden), 0.01),
        "ln1_b": n(ks[1], (1, hidden), 0.01),
        "w_attn": n(ks[2], (hidden, 3 * hidden)),
        "b_attn": n(ks[3], (1, 3 * hidden)),
        "w_proj": n(ks[4], (hidden, hidden)),
        "b_proj": n(ks[5], (1, hidden)),
        "ln2_g": 1.0 + n(ks[6], (1, hidden), 0.01),
        "ln2_b": n(ks[7], (1, hidden), 0.01),
        "w_fc1": n(ks[8], (hidden, 4 * hidden)),
        "b_fc1": n(ks[9], (1, 4 * hidden)),
        "w_fc2": n(ks[10], (4 * hidden, hidden)),
        "b_fc2": n(ks[11], (1, hidden)),
    }


if __name__ == "__main__":
    # config: hidden_size=32, num_heads=4, layer_norm_epsilon=1e-5, dropout ignored (eval)
    B, S, H, NH = 2, 8, 32, 4
    EPS = 1e-5

    key = jax.random.PRNGKey(0)
    kx, kp = jax.random.split(key)
    x = jax.random.normal(kx, (B, S, H), dtype=jnp.float32)
    params = make_params(kp, H)

    out = gpt2_layer(x, params, num_heads=NH, eps=EPS)
    out = jax.block_until_ready(out)

    ref = gpt2_layer_reference(x, params, num_heads=NH, eps=EPS)
    assert out.shape == (B, S, H)
    assert jnp.allclose(out, ref, atol=5e-3, rtol=5e-3), "mismatch vs JAX reference"

    print("KERNEL_OK")
</pallas_src>

<mosaic_0001>
module attributes {stable_mosaic.version = 11 : i64} {
  func.func @_qkv_kernel(%arg0: i32, %arg1: i32, %arg2: memref<1x8x32xf32, #tpu.memory_space<vmem>>, %arg3: memref<1x32xf32, #tpu.memory_space<vmem>>, %arg4: memref<1x32xf32, #tpu.memory_space<vmem>>, %arg5: memref<32x96xbf16, #tpu.memory_space<vmem>>, %arg6: memref<1x96xf32, #tpu.memory_space<vmem>>, %arg7: memref<1x4x8x8xbf16, #tpu.memory_space<vmem>>, %arg8: memref<1x4x8x8xbf16, #tpu.memory_space<vmem>>, %arg9: memref<1x4x8x8xbf16, #tpu.memory_space<vmem>>) attributes {dimension_semantics = [#tpu.dimension_semantics<parallel>, #tpu.dimension_semantics<parallel>], iteration_bounds = array<i64: 2, 1>, scalar_prefetch = 0 : i64, scratch_operands = 0 : i64, tpu.core_type = #tpu.core_type<tc>, window_params = [{transform_indices = @transform_0, window_bounds = array<i64: 1, 8, 32>}, {pipeline_mode = #tpu.pipeline_mode<synchronous>, transform_indices = @transform_1, window_bounds = array<i64: 1, 32>}, {pipeline_mode = #tpu.pipeline_mode<synchronous>, transform_indices = @transform_2, window_bounds = array<i64: 1, 32>}, {pipeline_mode = #tpu.pipeline_mode<synchronous>, transform_indices = @transform_3, window_bounds = array<i64: 32, 96>}, {pipeline_mode = #tpu.pipeline_mode<synchronous>, transform_indices = @transform_4, window_bounds = array<i64: 1, 96>}, {transform_indices = @transform_5, window_bounds = array<i64: 1, 4, 8, 8>}, {transform_indices = @transform_6, window_bounds = array<i64: 1, 4, 8, 8>}, {transform_indices = @transform_7, window_bounds = array<i64: 1, 4, 8, 8>}]} {
    %c0 = arith.constant 0 : index
    %c0_0 = arith.constant 0 : index
    %c0_1 = arith.constant 0 : index
    %0 = vector.load %arg2[%c0, %c0_0, %c0_1] : memref<1x8x32xf32, #tpu.memory_space<vmem>>, vector<1x8x32xf32>
    %1 = vector.shape_cast %0 : vector<1x8x32xf32> to vector<8x32xf32>
    %c0_2 = arith.constant 0 : index
    %c0_3 = arith.constant 0 : index
    %2 = vector.load %arg3[%c0_2, %c0_3] : memref<1x32xf32, #tpu.memory_space<vmem>>, vector<1x32xf32>
    %3 = vector.shape_cast %2 : vector<1x32xf32> to vector<32xf32>
    %c0_4 = arith.constant 0 : index
    %c0_5 = arith.constant 0 : index
    %4 = vector.load %arg4[%c0_4, %c0_5] : memref<1x32xf32, #tpu.memory_space<vmem>>, vector<1x32xf32>
    %5 = vector.shape_cast %4 : vector<1x32xf32> to vector<32xf32>
    %cst = arith.constant dense<0.000000e+00> : vector<8xf32>
    %6 = vector.multi_reduction <add>, %1, %cst [1] : vector<8x32xf32> to vector<8xf32>
    %7 = vector.shape_cast %6 : vector<8xf32> to vector<8x1xf32>
    %cst_6 = arith.constant 3.200000e+01 : f32
    %8 = vector.broadcast %cst_6 : f32 to vector<8x1xf32>
    %9 = arith.divf %7, %8 : vector<8x1xf32>
    %10 = vector.broadcast %9 : vector<8x1xf32> to vector<8x32xf32>
    %11 = arith.subf %1, %10 : vector<8x32xf32>
    %12 = arith.mulf %11, %11 : vector<8x32xf32>
    %cst_7 = arith.constant dense<0.000000e+00> : vector<8xf32>
    %13 = vector.multi_reduction <add>, %12, %cst_7 [1] : vector<8x32xf32> to vector<8xf32>
    %14 = vector.shape_cast %13 : vector<8xf32> to vector<8x1xf32>
    %cst_8 = arith.constant 3.200000e+01 : f32
    %15 = vector.broadcast %cst_8 : f32 to vector<8x1xf32>
    %16 = arith.divf %14, %15 : vector<8x1xf32>
    %17 = vector.broadcast %9 : vector<8x1xf32> to vector<8x32xf32>
    %18 = arith.subf %1, %17 : vector<8x32xf32>
    %cst_9 = arith.constant 9.99999974E-6 : f32
    %19 = vector.broadcast %cst_9 : f32 to vector<8x1xf32>
    %20 = arith.addf %16, %19 : vector<8x1xf32>
    %21 = math.rsqrt %20 : vector<8x1xf32>
    %22 = vector.broadcast %21 : vector<8x1xf32> to vector<8x32xf32>
    %23 = arith.mulf %18, %22 : vector<8x32xf32>
    %24 = vector.shape_cast %3 : vector<32xf32> to vector<1x32xf32>
    %25 = vector.broadcast %24 : vector<1x32xf32> to vector<8x32xf32>
    %26 = arith.mulf %23, %25 : vector<8x32xf32>
    %27 = vector.shape_cast %5 : vector<32xf32> to vector<1x32xf32>
    %28 = vector.broadcast %27 : vector<1x32xf32> to vector<8x32xf32>
    %29 = arith.addf %26, %28 : vector<8x32xf32>
    %30 = arith.truncf %29 : vector<8x32xf32> to vector<8x32xbf16>
    %c0_10 = arith.constant 0 : index
    %c0_11 = arith.constant 0 : index
    %31 = vector.load %arg5[%c0_10, %c0_11] : memref<32x96xbf16, #tpu.memory_space<vmem>>, vector<32x96xbf16>
    %cst_12 = arith.constant dense<0.000000e+00> : vector<8x96xf32>
    %32 = tpu.matmul %30, %31, %cst_12 {dimension_numbers = #tpu.dot_dimension_numbers<[1], [0], [0], [1], [0, 0, 1, 1], [], []>} : vector<8x32xbf16>, vector<32x96xbf16>, vector<8x96xf32> -> vector<8x96xf32>
    %c0_13 = arith.constant 0 : index
    %c0_14 = arith.constant 0 : index
    %33 = vector.load %arg6[%c0_13, %c0_14] : memref<1x96xf32, #tpu.memory_space<vmem>>, vector<1x96xf32>
    %34 = vector.shape_cast %33 : vector<1x96xf32> to vector<96xf32>
    %35 = vector.shape_cast %34 : vector<96xf32> to vector<1x96xf32>
    %36 = vector.broadcast %35 : vector<1x96xf32> to vector<8x96xf32>
    %37 = arith.addf %32, %36 : vector<8x96xf32>
    %38 = vector.extract_strided_slice %37 {offsets = [0, 0], sizes = [8, 8], strides = [1, 1]} : vector<8x96xf32> to vector<8x8xf32>
    %39 = arith.truncf %38 : vector<8x8xf32> to vector<8x8xbf16>
    %c0_15 = arith.constant 0 : index
    %c0_16 = arith.constant 0 : index
    %c0_17 = arith.constant 0 : index
    %c0_18 = arith.constant 0 : index
    %40 = vector.load %arg7[%c0_15, %c0_16, %c0_17, %c0_18] : memref<1x4x8x8xbf16, #tpu.memory_space<vmem>>, vector<1x1x8x8xbf16>
    %41 = vector.shape_cast %40 : vector<1x1x8x8xbf16> to vector<8x8xbf16>
    %42 = vector.shape_cast %39 : vector<8x8xbf16> to vector<1x1x8x8xbf16>
    tpu.vector_store %arg7[%c0_15, %c0_16, %c0_17, %c0_18], %42 {strides = array<i32>} : memref<1x4x8x8xbf16, #tpu.memory_space<vmem>>, vector<1x1x8x8xbf16>,
    %43 = vector.extract_strided_slice %37 {offsets = [0, 32], sizes = [8, 8], strides = [1, 1]} : vector<8x96xf32> to vector<8x8xf32>
    %44 = arith.truncf %43 : vector<8x8xf32> to vector<8x8xbf16>
    %c0_19 = arith.constant 0 : index
    %c0_20 = arith.constant 0 : index
    %c0_21 = arith.constant 0 : index
    %c0_22 = arith.constant 0 : index
    %45 = vector.load %arg8[%c0_19, %c0_20, %c0_21, %c0_22] : memref<1x4x8x8xbf16, #tpu.memory_space<vmem>>, vector<1x1x8x8xbf16>
    %46 = vector.shape_cast %45 : vector<1x1x8x8xbf16> to vector<8x8xbf16>
    %47 = vector.shape_cast %44 : vector<8x8xbf16> to vector<1x1x8x8xbf16>
    tpu.vector_store %arg8[%c0_19, %c0_20, %c0_21, %c0_22], %47 {strides = array<i32>} : memref<1x4x8x8xbf16, #tpu.memory_space<vmem>>, vector<1x1x8x8xbf16>,
    %48 = vector.extract_strided_slice %37 {offsets = [0, 64], sizes = [8, 8], strides = [1, 1]} : vector<8x96xf32> to vector<8x8xf32>
    %49 = arith.truncf %48 : vector<8x8xf32> to vector<8x8xbf16>
    %c0_23 = arith.constant 0 : index
    %c0_24 = arith.constant 0 : index
    %c0_25 = arith.constant 0 : index
    %c0_26 = arith.constant 0 : index
    %50 = vector.load %arg9[%c0_23, %c0_24, %c0_25, %c0_26] : memref<1x4x8x8xbf16, #tpu.memory_space<vmem>>, vector<1x1x8x8xbf16>
    %51 = vector.shape_cast %50 : vector<1x1x8x8xbf16> to vector<8x8xbf16>
    %52 = vector.shape_cast %49 : vector<8x8xbf16> to vector<1x1x8x8xbf16>
    tpu.vector_store %arg9[%c0_23, %c0_24, %c0_25, %c0_26], %52 {strides = array<i32>} : memref<1x4x8x8xbf16, #tpu.memory_space<vmem>>, vector<1x1x8x8xbf16>,
    %53 = vector.extract_strided_slice %37 {offsets = [0, 8], sizes = [8, 8], strides = [1, 1]} : vector<8x96xf32> to vector<8x8xf32>
    %54 = arith.truncf %53 : vector<8x8xf32> to vector<8x8xbf16>
    %c0_27 = arith.constant 0 : index
    %c1 = arith.constant 1 : index
    %c0_28 = arith.constant 0 : index
    %c0_29 = arith.constant 0 : index
    %55 = vector.load %arg7[%c0_27, %c1, %c0_28, %c0_29] : memref<1x4x8x8xbf16, #tpu.memory_space<vmem>>, vector<1x1x8x8xbf16>
    %56 = vector.shape_cast %55 : vector<1x1x8x8xbf16> to vector<8x8xbf16>
    %57 = vector.shape_cast %54 : vector<8x8xbf16> to vector<1x1x8x8xbf16>
    tpu.vector_store %arg7[%c0_27, %c1, %c0_28, %c0_29], %57 {strides = array<i32>} : memref<1x4x8x8xbf16, #tpu.memory_space<vmem>>, vector<1x1x8x8xbf16>,
    %58 = vector.extract_strided_slice %37 {offsets = [0, 40], sizes = [8, 8], strides = [1, 1]} : vector<8x96xf32> to vector<8x8xf32>
    %59 = arith.truncf %58 : vector<8x8xf32> to vector<8x8xbf16>
    %c0_30 = arith.constant 0 : index
    %c1_31 = arith.constant 1 : index
    %c0_32 = arith.constant 0 : index
    %c0_33 = arith.constant 0 : index
    %60 = vector.load %arg8[%c0_30, %c1_31, %c0_32, %c0_33] : memref<1x4x8x8xbf16, #tpu.memory_space<vmem>>, vector<1x1x8x8xbf16>
    %61 = vector.shape_cast %60 : vector<1x1x8x8xbf16> to vector<8x8xbf16>
    %62 = vector.shape_cast %59 : vector<8x8xbf16> to vector<1x1x8x8xbf16>
    tpu.vector_store %arg8[%c0_30, %c1_31, %c0_32, %c0_33], %62 {strides = array<i32>} : memref<1x4x8x8xbf16, #tpu.memory_space<vmem>>, vector<1x1x8x8xbf16>,
    %63 = vector.extract_strided_slice %37 {offsets = [0, 72], sizes = [8, 8], strides = [1, 1]} : vector<8x96xf32> to vector<8x8xf32>
    %64 = arith.truncf %63 : vector<8x8xf32> to vector<8x8xbf16>
    %c0_34 = arith.constant 0 : index
    %c1_35 = arith.constant 1 : index
    %c0_36 = arith.constant 0 : index
    %c0_37 = arith.constant 0 : index
    %65 = vector.load %arg9[%c0_34, %c1_35, %c0_36, %c0_37] : memref<1x4x8x8xbf16, #tpu.memory_space<vmem>>, vector<1x1x8x8xbf16>
    %66 = vector.shape_cast %65 : vector<1x1x8x8xbf16> to vector<8x8xbf16>
    %67 = vector.shape_cast %64 : vector<8x8xbf16> to vector<1x1x8x8xbf16>
    tpu.vector_store %arg9[%c0_34, %c1_35, %c0_36, %c0_37], %67 {strides = array<i32>} : memref<1x4x8x8xbf16, #tpu.memory_space<vmem>>, vector<1x1x8x8xbf16>,
    %68 = vector.extract_strided_slice %37 {offsets = [0, 16], sizes = [8, 8], strides = [1, 1]} : vector<8x96xf32> to vector<8x8xf32>
    %69 = arith.truncf %68 : vector<8x8xf32> to vector<8x8xbf16>
    %c0_38 = arith.constant 0 : index
    %c2 = arith.constant 2 : index
    %c0_39 = arith.constant 0 : index
    %c0_40 = arith.constant 0 : index
    %70 = vector.load %arg7[%c0_38, %c2, %c0_39, %c0_40] : memref<1x4x8x8xbf16, #tpu.memory_space<vmem>>, vector<1x1x8x8xbf16>
    %71 = vector.shape_cast %70 : vector<1x1x8x8xbf16> to vector<8x8xbf16>
    %72 = vector.shape_cast %69 : vector<8x8xbf16> to vector<1x1x8x8xbf16>
    tpu.vector_store %arg7[%c0_38, %c2, %c0_39, %c0_40], %72 {strides = array<i32>} : memref<1x4x8x8xbf16, #tpu.memory_space<vmem>>, vector<1x1x8x8xbf16>,
    %73 = vector.extract_strided_slice %37 {offsets = [0, 48], sizes = [8, 8], strides = [1, 1]} : vector<8x96xf32> to vector<8x8xf32>
    %74 = arith.truncf %73 : vector<8x8xf32> to vector<8x8xbf16>
    %c0_41 = arith.constant 0 : index
    %c2_42 = arith.constant 2 : index
    %c0_43 = arith.constant 0 : index
    %c0_44 = arith.constant 0 : index
    %75 = vector.load %arg8[%c0_41, %c2_42, %c0_43, %c0_44] : memref<1x4x8x8xbf16, #tpu.memory_space<vmem>>, vector<1x1x8x8xbf16>
    %76 = vector.shape_cast %75 : vector<1x1x8x8xbf16> to vector<8x8xbf16>
    %77 = vector.shape_cast %74 : vector<8x8xbf16> to vector<1x1x8x8xbf16>
    tpu.vector_store %arg8[%c0_41, %c2_42, %c0_43, %c0_44], %77 {strides = array<i32>} : memref<1x4x8x8xbf16, #tpu.memory_space<vmem>>, vector<1x1x8x8xbf16>,
    %78 = vector.extract_strided_slice %37 {offsets = [0, 80], sizes = [8, 8], strides = [1, 1]} : vector<8x96xf32> to vector<8x8xf32>
    %79 = arith.truncf %78 : vector<8x8xf32> to vector<8x8xbf16>
    %c0_45 = arith.constant 0 : index
    %c2_46 = arith.constant 2 : index
    %c0_47 = arith.constant 0 : index
    %c0_48 = arith.constant 0 : index
    %80 = vector.load %arg9[%c0_45, %c2_46, %c0_47, %c0_48] : memref<1x4x8x8xbf16, #tpu.memory_space<vmem>>, vector<1x1x8x8xbf16>
    %81 = vector.shape_cast %80 : vector<1x1x8x8xbf16> to vector<8x8xbf16>
    %82 = vector.shape_cast %79 : vector<8x8xbf16> to vector<1x1x8x8xbf16>
    tpu.vector_store %arg9[%c0_45, %c2_46, %c0_47, %c0_48], %82 {strides = array<i32>} : memref<1x4x8x8xbf16, #tpu.memory_space<vmem>>, vector<1x1x8x8xbf16>,
    %83 = vector.extract_strided_slice %37 {offsets = [0, 24], sizes = [8, 8], strides = [1, 1]} : vector<8x96xf32> to vector<8x8xf32>
    %84 = arith.truncf %83 : vector<8x8xf32> to vector<8x8xbf16>
    %c0_49 = arith.constant 0 : index
    %c3 = arith.constant 3 : index
    %c0_50 = arith.constant 0 : index
    %c0_51 = arith.constant 0 : index
    %85 = vector.load %arg7[%c0_49, %c3, %c0_50, %c0_51] : memref<1x4x8x8xbf16, #tpu.memory_space<vmem>>, vector<1x1x8x8xbf16>
    %86 = vector.shape_cast %85 : vector<1x1x8x8xbf16> to vector<8x8xbf16>
    %87 = vector.shape_cast %84 : vector<8x8xbf16> to vector<1x1x8x8xbf16>
    tpu.vector_store %arg7[%c0_49, %c3, %c0_50, %c0_51], %87 {strides = array<i32>} : memref<1x4x8x8xbf16, #tpu.memory_space<vmem>>, vector<1x1x8x8xbf16>,
    %88 = vector.extract_strided_slice %37 {offsets = [0, 56], sizes = [8, 8], strides = [1, 1]} : vector<8x96xf32> to vector<8x8xf32>
    %89 = arith.truncf %88 : vector<8x8xf32> to vector<8x8xbf16>
    %c0_52 = arith.constant 0 : index
    %c3_53 = arith.constant 3 : index
    %c0_54 = arith.constant 0 : index
    %c0_55 = arith.constant 0 : index
    %90 = vector.load %arg8[%c0_52, %c3_53, %c0_54, %c0_55] : memref<1x4x8x8xbf16, #tpu.memory_space<vmem>>, vector<1x1x8x8xbf16>
    %91 = vector.shape_cast %90 : vector<1x1x8x8xbf16> to vector<8x8xbf16>
    %92 = vector.shape_cast %89 : vector<8x8xbf16> to vector<1x1x8x8xbf16>
    tpu.vector_store %arg8[%c0_52, %c3_53, %c0_54, %c0_55], %92 {strides = array<i32>} : memref<1x4x8x8xbf16, #tpu.memory_space<vmem>>, vector<1x1x8x8xbf16>,
    %93 = vector.extract_strided_slice %37 {offsets = [0, 88], sizes = [8, 8], strides = [1, 1]} : vector<8x96xf32> to vector<8x8xf32>
    %94 = arith.truncf %93 : vector<8x8xf32> to vector<8x8xbf16>
    %c0_56 = arith.constant 0 : index
    %c3_57 = arith.constant 3 : index
    %c0_58 = arith.constant 0 : index
    %c0_59 = arith.constant 0 : index
    %95 = vector.load %arg9[%c0_56, %c3_57, %c0_58, %c0_59] : memref<1x4x8x8xbf16, #tpu.memory_space<vmem>>, vector<1x1x8x8xbf16>
    %96 = vector.shape_cast %95 : vector<1x1x8x8xbf16> to vector<8x8xbf16>
    %97 = vector.shape_cast %94 : vector<8x8xbf16> to vector<1x1x8x8xbf16>
    tpu.vector_store %arg9[%c0_56, %c3_57, %c0_58, %c0_59], %97 {strides = array<i32>} : memref<1x4x8x8xbf16, #tpu.memory_space<vmem>>, vector<1x1x8x8xbf16>,
    return
  }
  func.func @transform_0(%arg0: i32, %arg1: i32) -> (i32, i32, i32) {
    %c0_i32 = arith.constant 0 : i32
    %c0_i32_0 = arith.constant 0 : i32
    return %arg0, %arg1, %c0_i32 : i32, i32, i32
  }
  func.func @transform_1(%arg0: i32, %arg1: i32) -> (i32, i32) {
    %c0_i32 = arith.constant 0 : i32
    %c0_i32_0 = arith.constant 0 : i32
    %c0_i32_1 = arith.constant 0 : i32
    return %c0_i32, %c0_i32_0 : i32, i32
  }
  func.func @transform_2(%arg0: i32, %arg1: i32) -> (i32, i32) {
    %c0_i32 = arith.constant 0 : i32
    %c0_i32_0 = arith.constant 0 : i32
    %c0_i32_1 = arith.constant 0 : i32
    return %c0_i32, %c0_i32_0 : i32, i32
  }
  func.func @transform_3(%arg0: i32, %arg1: i32) -> (i32, i32) {
    %c0_i32 = arith.constant 0 : i32
    %c0_i32_0 = arith.constant 0 : i32
    %c0_i32_1 = arith.constant 0 : i32
    return %c0_i32, %c0_i32_0 : i32, i32
  }
  func.func @transform_4(%arg0: i32, %arg1: i32) -> (i32, i32) {
    %c0_i32 = arith.constant 0 : i32
    %c0_i32_0 = arith.constant 0 : i32
    %c0_i32_1 = arith.constant 0 : i32
    return %c0_i32, %c0_i32_0 : i32, i32
  }
  func.func @transform_5(%arg0: i32, %arg1: i32) -> (i32, i32, i32, i32) {
    %c0_i32 = arith.constant 0 : i32
    %c0_i32_0 = arith.constant 0 : i32
    %c0_i32_1 = arith.constant 0 : i32
    return %arg0, %c0_i32, %arg1, %c0_i32_0 : i32, i32, i32, i32
  }
  func.func @transform_6(%arg0: i32, %arg1: i32) -> (i32, i32, i32, i32) {
    %c0_i32 = arith.constant 0 : i32
    %c0_i32_0 = arith.constant 0 : i32
    %c0_i32_1 = arith.constant 0 : i32
    return %arg0, %c0_i32, %arg1, %c0_i32_0 : i32, i32, i32, i32
  }
  func.func @transform_7(%arg0: i32, %arg1: i32) -> (i32, i32, i32, i32) {
    %c0_i32 = arith.constant 0 : i32
    %c0_i32_0 = arith.constant 0 : i32
    %c0_i32_1 = arith.constant 0 : i32
    return %arg0, %c0_i32, %arg1, %c0_i32_0 : i32, i32, i32, i32
  }
}

</mosaic_0001>

<llo_original>
// kernel: tpu_custom_call.1
$region0: #{tpu_custom_call.1}
  #allocation0 [shape = 'u32[]', space=smem, size = 0x4, offset = 0x4, fixed_abs, tag = 'smem constant byte address 0x4 - core index']
  #allocation1 [shape = 'u32[144,128]{1,0:T(1,128)}', space=vmem, size = 0x12000, scoped, tag = 'internal scratch']
  %s0 = inlined_call_operand.hbm [shape: f32[2,8,32], index: 0, kind: input, shape index: {}]
  %s1 = inlined_call_operand.vmem [shape: f32[1,32], index: 1, kind: input, shape index: {}]
  %s2 = inlined_call_operand.vmem [shape: f32[1,32], index: 2, kind: input, shape index: {}]
  %s3 = inlined_call_operand.hbm [shape: bf16[32,96], index: 3, kind: input, shape index: {}]
  %s4 = inlined_call_operand.vmem [shape: f32[1,96], index: 4, kind: input, shape index: {}]
  %s5 = inlined_call_operand.hbm [shape: bf16[2,4,8,8], index: 5, kind: output, shape index: {0}]
  %s6 = inlined_call_operand.hbm [shape: bf16[2,4,8,8], index: 6, kind: output, shape index: {1}]
  %s7 = inlined_call_operand.hbm [shape: bf16[2,4,8,8], index: 7, kind: output, shape index: {2}]
  %8 = xla_tuple %s5, %s6, %s7
  %s9 = sld [smem:[#allocation0]]
  $region77: #{tpu_custom_call.1} parent=0
    _
  %s11 = ssub.s32 1, %s9
  %s12 = scalar_select 0, %s11, %s9
  $region1: #{tpu_custom_call.1} parent=0
    #allocation2 [shape = 'u8[8192]{0}', space=vmem, size = 0x2000, scoped, tag = 'input window, operand 0']
    #allocation3 [shape = 's32[2]{0}', space=sflag, size = 0x8, scoped, tag = 'scoped memory for tpu_custom_call.1']
    #allocation4 [shape = 's32[2]{0}', space=sflag, size = 0x8, scoped, tag = 'scoped memory for tpu_custom_call.1']
    #allocation5 [shape = 'u8[8192]{0}', space=vmem, size = 0x2000, scoped, tag = 'input window, operand 3, single buffered']
    #allocation6 [shape = 's32[1]{0}', space=sflag, size = 0x4, scoped, tag = 'scoped memory for tpu_custom_call.1']
    #allocation7 [shape = 'u8[16384]{0}', space=vmem, size = 0x4000, scoped, tag = 'output window, operand 0']
    #allocation8 [shape = 'u8[16384]{0}', space=vmem, size = 0x4000, scoped, tag = 'output window, operand 1']
    #allocation9 [shape = 's32[2]{0}', space=sflag, size = 0x8, scoped, tag = 'scoped memory for tpu_custom_call.1']
    #allocation10 [shape = 'u8[16384]{0}', space=vmem, size = 0x4000, scoped, tag = 'output window, operand 2']
    %13 = vsyncpa [#allocation3], 0
    %s14 = scalar_lea.sflag [#allocation3], 1
    %15 = vsyncpa %s14, 0
    %16 = vsyncpa [#allocation6], 0
    %17 = vsyncpa [#allocation4], 0
    %s18 = scalar_lea.sflag [#allocation4], 1
    %19 = vsyncpa %s18, 0
    %20 = vsyncpa [#allocation9], 0
    %s21 = scalar_lea.sflag [#allocation9], 1
    %22 = vsyncpa %s21, 0
    loop: start=0, step=1, limit=4
    $region2: #{tpu_custom_call.1} parent=1 // loop_pre_header
      _
    $region3: #{tpu_custom_call.1} parent=1 // loop_header
      %s24 = sphi 0, %s28
      %p25 = scmp.ge.s32.totalorder %s24, 4
      %s31 = sphi 0, %s43
      %s32 = sphi 0, %s39
      %s33 = sphi 0, %s31
      %s34 = sphi 0, %s32
      %s35 = sphi 0, %s33
      %s36 = sphi 0, %s34
      %s48 = sphi 0, %s50
      %s51 = sphi 0, %s48
      %s52 = sphi 0, %s51
      %s68 = sphi 0, %s52
      %s72 = sphi 0, %s72
      %s74 = sphi 0, %s72
      %s75 = sphi 0, %s74
      %s89 = sphi 0, %s75
      %s93 = sphi 0, %s93
      %s95 = sphi 0, %s93
      %s96 = sphi 0, %s95
      %s110 = sphi 0, %s96
      %s114 = sphi 0, %s114
      %s116 = sphi 0, %s114
      %s117 = sphi 0, %s116
      %s131 = sphi 0, %s117
      %s135 = sphi 0, %s135
      %s137 = sphi 0, %s135
      %s138 = sphi 0, %s137
      %s152 = sphi 0, %s138
      %s160 = sphi 0, %s162
      %s163 = sphi 0, %s160
      %s164 = sphi 0, %s163
      %s180 = sphi 0, %s164
      %s188 = sphi 0, %s190
      %s191 = sphi 0, %s188
      %s192 = sphi 0, %s191
      %s208 = sphi 0, %s192
      %s216 = sphi 0, %s218
      %s219 = sphi 0, %s216
      %s220 = sphi 0, %s219
      %s236 = sphi 0, %s220
    $region4: #{tpu_custom_call.1} parent=1 // loop_header_branch
      %27 = sbr.rel (%p25) target = $region8
    $region5: #{tpu_custom_call.1} parent=1 // loop_body
      %s29 = ssub.s32 %s24, 1
      %s30 = ssub.s32 %s24, 2
      %s37 = sadd.s32 1, %s32
      %p38 = scmp.ge.s32.totalorder %s37, 1
      %s39 = scalar_select %p38, 0, %s37
      %s40 = sadd.s32 1, %s31
      %s41 = scalar_select %p38, %s40, %s31
      %p42 = scmp.ge.s32.totalorder %s41, 2
      %s43 = scalar_select %p42, 0, %s41
      %s44 = ssub.s32 %s31, %s43
      %s45 = ssub.s32 %s32, %s39
      %s46 = sor.u32 %s44, %s45
      %p47 = scmp.eq.s32.totalorder %s46, 0
      %s49 = sadd.s32 %s48, 1
      %s50 = scalar_select %p47, %s48, %s49
      %p53 = pneg %p47
      %p54 = scmp.eq.s32.totalorder %s24, 1
      %p55 = por %p53, %p54
      %p56 = scmp.ne.s32.totalorder %s48, %s51
      %p57 = scmp.eq.s32.totalorder %s24, 0
      %p58 = por %p56, %p57
      %p59 = scmp.ne.s32.totalorder %s48, %s51
      %p60 = scmp.eq.s32.totalorder %s29, 1
      %p61 = por %p59, %p60
      %p62 = scmp.ne.s32.totalorder %s51, %s52
      %p63 = scmp.eq.s32.totalorder %s29, 0
      %p64 = por %p62, %p63
      %p65 = scmp.ne.s32.totalorder %s51, %s52
      %p66 = scmp.eq.s32.totalorder %s30, 1
      %p67 = por %p65, %p66
      %p69 = scmp.ne.s32.totalorder %s52, %s68
      %p70 = scmp.eq.s32.totalorder %s30, 0
      %p71 = por %p69, %p70
      %s73 = sadd.s32 %s72, 1
      %p76 = scmp.eq.s32.totalorder %s24, 1
      %p77 = scmp.ne.s32.totalorder %s72, %s74
      %p78 = scmp.eq.s32.totalorder %s24, 0
      %p79 = por %p77, %p78
      %p80 = scmp.ne.s32.totalorder %s72, %s74
      %p81 = scmp.eq.s32.totalorder %s29, 1
      %p82 = por %p80, %p81
      %p83 = scmp.ne.s32.totalorder %s74, %s75
      %p84 = scmp.eq.s32.totalorder %s29, 0
      %p85 = por %p83, %p84
      %p86 = scmp.ne.s32.totalorder %s74, %s75
      %p87 = scmp.eq.s32.totalorder %s30, 1
      %p88 = por %p86, %p87
      %p90 = scmp.ne.s32.totalorder %s75, %s89
      %p91 = scmp.eq.s32.totalorder %s30, 0
      %p92 = por %p90, %p91
      %s94 = sadd.s32 %s93, 1
      %p97 = scmp.eq.s32.totalorder %s24, 1
      %p98 = scmp.ne.s32.totalorder %s93, %s95
      %p99 = scmp.eq.s32.totalorder %s24, 0
      %p100 = por %p98, %p99
      %p101 = scmp.ne.s32.totalorder %s93, %s95
      %p102 = scmp.eq.s32.totalorder %s29, 1
      %p103 = por %p101, %p102
      %p104 = scmp.ne.s32.totalorder %s95, %s96
      %p105 = scmp.eq.s32.totalorder %s29, 0
      %p106 = por %p104, %p105
      %p107 = scmp.ne.s32.totalorder %s95, %s96
      %p108 = scmp.eq.s32.totalorder %s30, 1
      %p109 = por %p107, %p108
      %p111 = scmp.ne.s32.totalorder %s96, %s110
      %p112 = scmp.eq.s32.totalorder %s30, 0
      %p113 = por %p111, %p112
      %s115 = sadd.s32 %s114, 1
      %p118 = scmp.eq.s32.totalorder %s24, 1
      %p119 = scmp.ne.s32.totalorder %s114, %s116
      %p120 = scmp.eq.s32.totalorder %s24, 0
      %p121 = por %p119, %p120
      %p122 = scmp.ne.s32.totalorder %s114, %s116
      %p123 = scmp.eq.s32.totalorder %s29, 1
      %p124 = por %p122, %p123
      %p125 = scmp.ne.s32.totalorder %s116, %s117
      %p126 = scmp.eq.s32.totalorder %s29, 0
      %p127 = por %p125, %p126
      %p128 = scmp.ne.s32.totalorder %s116, %s117
      %p129 = scmp.eq.s32.totalorder %s30, 1
      %p130 = por %p128, %p129
      %p132 = scmp.ne.s32.totalorder %s117, %s131
      %p133 = scmp.eq.s32.totalorder %s30, 0
      %p134 = por %p132, %p133
      %s136 = sadd.s32 %s135, 1
      %p139 = scmp.eq.s32.totalorder %s24, 1
      %p140 = scmp.ne.s32.totalorder %s135, %s137
      %p141 = scmp.eq.s32.totalorder %s24, 0
      %p142 = por %p140, %p141
      %p143 = scmp.ne.s32.totalorder %s135, %s137
      %p144 = scmp.eq.s32.totalorder %s29, 1
      %p145 = por %p143, %p144
      %p146 = scmp.ne.s32.totalorder %s137, %s138
      %p147 = scmp.eq.s32.totalorder %s29, 0
      %p148 = por %p146, %p147
      %p149 = scmp.ne.s32.totalorder %s137, %s138
      %p150 = scmp.eq.s32.totalorder %s30, 1
      %p151 = por %p149, %p150
      %p153 = scmp.ne.s32.totalorder %s138, %s152
      %p154 = scmp.eq.s32.totalorder %s30, 0
      %p155 = por %p153, %p154
      %s156 = ssub.s32 %s31, %s43
      %s157 = ssub.s32 %s32, %s39
      %s158 = sor.u32 %s156, %s157
      %p159 = scmp.eq.s32.totalorder %s158, 0
      %s161 = sadd.s32 %s160, 1
      %s162 = scalar_select %p159, %s160, %s161
      %p165 = pneg %p159
      %p166 = scmp.eq.s32.totalorder %s24, 1
      %p167 = por %p165, %p166
      %p168 = scmp.ne.s32.totalorder %s160, %s163
      %p169 = scmp.eq.s32.totalorder %s24, 0
      %p170 = por %p168, %p169
      %p171 = scmp.ne.s32.totalorder %s160, %s163
      %p172 = scmp.eq.s32.totalorder %s29, 1
      %p173 = por %p171, %p172
      %p174 = scmp.ne.s32.totalorder %s163, %s164
      %p175 = scmp.eq.s32.totalorder %s29, 0
      %p176 = por %p174, %p175
      %p177 = scmp.ne.s32.totalorder %s163, %s164
      %p178 = scmp.eq.s32.totalorder %s30, 1
      %p179 = por %p177, %p178
      %p181 = scmp.ne.s32.totalorder %s164, %s180
      %p182 = scmp.eq.s32.totalorder %s30, 0
      %p183 = por %p181, %p182
      %s184 = ssub.s32 %s31, %s43
      %s185 = ssub.s32 %s32, %s39
      %s186 = sor.u32 %s184, %s185
      %p187 = scmp.eq.s32.totalorder %s186, 0
      %s189 = sadd.s32 %s188, 1
      %s190 = scalar_select %p187, %s188, %s189
      %p193 = pneg %p187
      %p194 = scmp.eq.s32.totalorder %s24, 1
      %p195 = por %p193, %p194
      %p196 = scmp.ne.s32.totalorder %s188, %s191
      %p197 = scmp.eq.s32.totalorder %s24, 0
      %p198 = por %p196, %p197
      %p199 = scmp.ne.s32.totalorder %s188, %s191
      %p200 = scmp.eq.s32.totalorder %s29, 1
      %p201 = por %p199, %p200
      %p202 = scmp.ne.s32.totalorder %s191, %s192
      %p203 = scmp.eq.s32.totalorder %s29, 0
      %p204 = por %p202, %p203
      %p205 = scmp.ne.s32.totalorder %s191, %s192
      %p206 = scmp.eq.s32.totalorder %s30, 1
      %p207 = por %p205, %p206
      %p209 = scmp.ne.s32.totalorder %s192, %s208
      %p210 = scmp.eq.s32.totalorder %s30, 0
      %p211 = por %p209, %p210
      %s212 = ssub.s32 %s31, %s43
      %s213 = ssub.s32 %s32, %s39
      %s214 = sor.u32 %s212, %s213
      %p215 = scmp.eq.s32.totalorder %s214, 0
      %s217 = sadd.s32 %s216, 1
      %s218 = scalar_select %p215, %s216, %s217
      %p221 = pneg %p215
      %p222 = scmp.eq.s32.totalorder %s24, 1
      %p223 = por %p221, %p222
      %p224 = scmp.ne.s32.totalorder %s216, %s219
      %p225 = scmp.eq.s32.totalorder %s24, 0
      %p226 = por %p224, %p225
      %p227 = scmp.ne.s32.totalorder %s216, %s219
      %p228 = scmp.eq.s32.totalorder %s29, 1
      %p229 = por %p227, %p228
      %p230 = scmp.ne.s32.totalorder %s219, %s220
      %p231 = scmp.eq.s32.totalorder %s29, 0
      %p232 = por %p230, %p231
      %p233 = scmp.ne.s32.totalorder %s219, %s220
      %p234 = scmp.eq.s32.totalorder %s30, 1
      %p235 = por %p233, %p234
      %p237 = scmp.ne.s32.totalorder %s220, %s236
      %p238 = scmp.eq.s32.totalorder %s30, 0
      %p239 = por %p237, %p238
      %p240 = scmp.le.s32.totalorder 1, %s24
      %p241 = scmp.lt.s32.totalorder %s24, 3
      %p242 = pnand %p240, %p241
      %p243 = pneg %p242
      // Predicated region
      $region9: #{tpu_custom_call.1} parent=5 // pred_check
        _
      $region10: #{tpu_custom_call.1} parent=5 // pred_check_branch
        %245 = sbr.rel (%p242) target = $region12
      $region11: #{tpu_custom_call.1} parent=5 // pred_region
        %s246 = ssub.s32 %s24, 1
        // Predicated region
        $region13: #{tpu_custom_call.1} parent=11 // pred_check
          %p247 = pneg %p85
        $region14: #{tpu_custom_call.1} parent=11 // pred_check_branch
          %249 = sbr.rel (%p247) target = $region16
        $region15: #{tpu_custom_call.1} parent=11 // pred_region
          _
        $region16: #{tpu_custom_call.1} parent=11 // pred_fallthru
          _
        // Predicated region
        $region17: #{tpu_custom_call.1} parent=11 // pred_check
          %p250 = pneg %p106
        $region18: #{tpu_custom_call.1} parent=11 // pred_check_branch
          %252 = sbr.rel (%p250) target = $region20
        $region19: #{tpu_custom_call.1} parent=11 // pred_region
          _
        $region20: #{tpu_custom_call.1} parent=11 // pred_fallthru
          _
        // Predicated region
        $region21: #{tpu_custom_call.1} parent=11 // pred_check
          %p253 = pneg %p127
        $region22: #{tpu_custom_call.1} parent=11 // pred_check_branch
          %255 = sbr.rel (%p253) target = $region24
        $region23: #{tpu_custom_call.1} parent=11 // pred_region
          %s257 = ssub.s32 256, 256
          %258 = vsyncadd [#allocation6], %s257
          %s259 = sshll.u32 [#allocation5], 4
          %s260 = int_to_ptr.vmem [resolvable:$true] %s259
          %265 = dma.hbm_to_vmem [thread:$0]  %s3, 256, %s260, [#allocation6], 64, 64, 4
        $region24: #{tpu_custom_call.1} parent=11 // pred_fallthru
          _
        // Predicated region
        $region25: #{tpu_custom_call.1} parent=11 // pred_check
          %p266 = pneg %p148
        $region26: #{tpu_custom_call.1} parent=11 // pred_check_branch
          %268 = sbr.rel (%p266) target = $region28
        $region27: #{tpu_custom_call.1} parent=11 // pred_region
          _
        $region28: #{tpu_custom_call.1} parent=11 // pred_fallthru
          _
      $region12: #{tpu_custom_call.1} parent=5 // pred_fallthru
        _
      %p269 = scmp.lt.s32.totalorder %s24, 2
      // Predicated region
      $region29: #{tpu_custom_call.1} parent=5 // pred_check
        %p270 = pneg %p269
      $region30: #{tpu_custom_call.1} parent=5 // pred_check_branch
        %272 = sbr.rel (%p270) target = $region32
      $region31: #{tpu_custom_call.1} parent=5 // pred_region
        // Predicated region
        $region33: #{tpu_custom_call.1} parent=31 // pred_check
          %p273 = pneg %p58
        $region34: #{tpu_custom_call.1} parent=31 // pred_check_branch
          %275 = sbr.rel (%p273) target = $region36
        $region35: #{tpu_custom_call.1} parent=31 // pred_region
          %s276 = sand.u32 %s48, 1
          %s277 = scalar_lea.sflag [#allocation3], %s276
          %s278 = sand.u32 %s48, 1
          %s279 = smul.addr %s278, 8
          %s280 = scalar_lea.vmem [#allocation2], %s279
          %s282 = ssub.s32 128, 128
          %283 = vsyncadd %s277, %s282
          %s284 = sadd.s32 %s32, %s31
          %s285 = smul.addr %s284, 128
          %s286 = scalar_lea.hbm %s0, %s285
          %s288 = sshll.u32 %s280, 4
          %s289 = int_to_ptr.vmem [resolvable:$true] %s288
          %291 = dma.hbm_to_vmem [thread:$0]  %s286, 128, %s289, %s277
        $region36: #{tpu_custom_call.1} parent=31 // pred_fallthru
          _
      $region32: #{tpu_custom_call.1} parent=5 // pred_fallthru
        _
      %p292 = scmp.le.s32.totalorder 1, %s24
      %p293 = scmp.lt.s32.totalorder %s24, 3
      %p294 = pnand %p292, %p293
      %p295 = pneg %p294
      // Predicated region
      $region37: #{tpu_custom_call.1} parent=5 // pred_check
        _
      $region38: #{tpu_custom_call.1} parent=5 // pred_check_branch
        %297 = sbr.rel (%p294) target = $region40
      $region39: #{tpu_custom_call.1} parent=5 // pred_region
        %s298 = ssub.s32 %s24, 1
        %s299 = sand.u32 %s51, 1
        %s300 = scalar_lea.sflag [#allocation3], %s299
        %s301 = sand.u32 %s51, 1
        %s302 = smul.addr %s301, 8
        %s303 = scalar_lea.vmem [#allocation2], %s302
        // Predicated region
        $region41: #{tpu_custom_call.1} parent=39 // pred_check
          %p304 = pneg %p64
        $region42: #{tpu_custom_call.1} parent=39 // pred_check_branch
          %306 = sbr.rel (%p304) target = $region44
        $region43: #{tpu_custom_call.1} parent=39 // pred_region
          %307 = dma.done %s300, 128
        $region44: #{tpu_custom_call.1} parent=39 // pred_fallthru
          _
        // Predicated region
        $region45: #{tpu_custom_call.1} parent=39 // pred_check
          %p308 = pneg %p127
        $region46: #{tpu_custom_call.1} parent=39 // pred_check_branch
          %310 = sbr.rel (%p308) target = $region48
        $region47: #{tpu_custom_call.1} parent=39 // pred_region
          %311 = dma.done [#allocation6], 256
        $region48: #{tpu_custom_call.1} parent=39 // pred_fallthru
          _
        %s312 = sand.u32 %s51, 1
        %s313 = scalar_lea.sflag [#allocation3], %s312
        %s314 = sand.u32 %s51, 1
        %s315 = smul.addr %s314, 8
        %s316 = scalar_lea.vmem [#allocation2], %s315
        %p317 = pneg %p64
        %p318 = pneg %p61
        %p319 = pneg %p85
        %p320 = pneg %p82
        %p321 = pneg %p106
        %p322 = pneg %p103
        %p323 = pneg %p127
        %p324 = pneg %p124
        %p325 = pneg %p148
        %p326 = pneg %p145
        %p327 = pneg %p176
        %p328 = pneg %p173
        %s329 = sand.u32 %s163, 1
        %s330 = scalar_lea.sflag [#allocation4], %s329
        %s331 = sand.u32 %s163, 1
        %s332 = smul.addr %s331, 16
        %s333 = scalar_lea.vmem [#allocation7], %s332
        %p334 = pneg %p204
        %p335 = pneg %p201
        %s336 = sand.u32 %s29, 1
        %s337 = scalar_lea.sflag [#allocation9], %s336
        %s338 = sand.u32 %s191, 1
        %s339 = smul.addr %s338, 16
        %s340 = scalar_lea.vmem [#allocation8], %s339
        %p341 = pneg %p232
        %p342 = pneg %p229
        %s343 = sand.u32 %s29, 1
        %s344 = scalar_lea.sflag [#allocation9], %s343
        %s345 = sand.u32 %s219, 1
        %s346 = smul.addr %s345, 16
        %s347 = scalar_lea.vmem [#allocation10], %s346
        %v349 = vld [vmem:[%s303] sm:$0xff]
        %v350 = vld [vmem:[%s1] sm:$0x1]
        %v351 = vld [vmem:[%s2] sm:$0x1]
        %vm352 = vcmask 261120
        %v353 = vsel %vm352, %v349, 0.0
        %354 = vadd.xlane.f32.xlu0 %v353
        %v355 = vpop.xlane.xlu0 %354
        %v356 = vrcp.pop 32.0
        %v357 = vmul.f32 %v355, %v356
        %v358 = vsub.f32 %v349, %v357
        %v359 = vmul.f32 %v358, %v358
        %v360 = vsel %vm352, %v359, 0.0
        %361 = vadd.xlane.f32.xlu0 %v360
        %v362 = vpop.xlane.xlu0 %361
        %v363 = vmul.f32 %v362, %v356
        %v364 = vadd.f32 %v363, 1e-05
        %v365 = vrsqrt.pop %v364
        %v366 = vmul.f32 %v358, %v365
        %v368 = vlaneseq
        %v369 = vshrl.u32 %v368, 7
        %v370 = vsub.s32 0, %v369
        %v371 = vrot.slane %v350, %v370
        %v373 = vmul.f32 %v366, %v371
        %v375 = vlaneseq
        %v376 = vshrl.u32 %v375, 7
        %v377 = vsub.s32 0, %v376
        %v378 = vrot.slane %v351, %v377
        %v380 = vadd.f32 %v373, %v378
        %v381 = vpack.c.bf16 %v380, %v380
        %v382 = vld [vmem:[#allocation5] sm:$0xf]
        %v383 = vld [vmem:[#allocation5 + $0x4] sm:$0xf]
        %v384 = vld [vmem:[#allocation5 + $0x8] sm:$0xf]
        %v385 = vld [vmem:[#allocation5 + $0xc] sm:$0xf]
        %v386 = vld [vmem:[%s4] sm:$0x1]
        %v388 = vlaneseq
        %v389 = vshrl.u32 %v388, 7
        %v390 = vsub.s32 0, %v389
        %v391 = vrot.slane %v386, %v390
        %v397 = vunpack.c.l.b16 %v382
        %v398 = vunpack.c.l.b16 %v383
        %v399 = vunpack.c.l.b16 %v384
        %v400 = vunpack.c.l.b16 %v385
        %v401 = vpack.c.b16 %v398, %v397
        %v402 = vpack.c.b16 %v400, %v399
        %v406 = vsel %vm352, %v381, 0
        %408 = vmatprep.subr.bf16.mxu0 0
        %409 = vmatpush1.bf16.msra.mxu0 %v401
        %410 = vmatprep.subr.bf16.mxu0 0
        %411 = vmatpush1.bf16.msra.mxu0 %v402
        %412 = vmatprep.subr.bf16.mxu0 0
        %413 = vmatpush1.bf16.msra.mxu0 0
        %414 = vmatprep.subr.bf16.mxu0 0
        %415 = vmatpush1.bf16.msra.mxu0 0
        %416 = vmatprep.subr.bf16.mxu0 0
        %417 = vmatpush1.bf16.msra.mxu0 0
        %418 = vmatprep.subr.bf16.mxu0 0
        %419 = vmatpush1.bf16.msra.mxu0 0
        %420 = vmatprep.subr.bf16.mxu0 0
        %421 = vmatpush1.bf16.msra.mxu0 0
        %422 = vmatprep.subr.bf16.mxu0 0
        %423 = vmatpush1.bf16.msra.mxu0 0
        %424 = vmatprep.subr.bf16.mxu0 0
        %425 = vmatpush1.bf16.msra.mxu0 0
        %426 = vmatprep.subr.bf16.mxu0 0
        %427 = vmatpush1.bf16.msra.mxu0 0
        %428 = vmatprep.subr.bf16.mxu0 0
        %429 = vmatpush1.bf16.msra.mxu0 0
        %430 = vmatprep.subr.bf16.mxu0 0
        %431 = vmatpush1.bf16.msra.mxu0 0
        %432 = vmatprep.subr.bf16.mxu0 0
        %433 = vmatpush1.bf16.msra.mxu0 0
        %434 = vmatprep.subr.bf16.mxu0 0
        %435 = vmatpush1.bf16.msra.mxu0 0
        %436 = vmatprep.subr.bf16.mxu0 0
        %437 = vmatpush1.bf16.msra.mxu0 0
        %438 = vmatprep.subr.bf16.mxu0 0
        %439 = vmatpush1.bf16.msra.mxu0 0
        %440 = vmatprep.mubr.bf16.mxu0 0
        %441 = vmatmul.mubr.bf16.gmra.mrb[0].mxu0 %v406
        %v442 = vpop.f32.mrb[0].mxu0
        %v443 = vadd.f32 %v391, %v442
        %v444 = vpop.f32.mrb[0].mxu0
        %v445 = vpop.f32.mrb[0].mxu0
        %v446 = vpop.f32.mrb[0].mxu0
        %447 = vdwg.mxu0
        %v448 = vpack.c.bf16 %v443, %v443
        %vm449 = vcmask 60416
        %450 = vst.msk [vmem:[%s333] sm:$0xf] %vm449, %v448
        %v452 = vunpack.c.l.b16 %v448
        %v453 = vpack.c.b16 %v452, %v452
        %454 = vrot.lane.b32.xlu0 %v453, 96
        %v455 = vpop.permute.xlu0 %454
        %457 = vst.msk [vmem:[%s340] sm:$0xf] %vm449, %v455
        %458 = vrot.lane.b32.xlu0 %v453, 64
        %v459 = vpop.permute.xlu0 %458
        %461 = vst.msk [vmem:[%s347] sm:$0xf] %vm449, %v459
        %462 = vrot.lane.b32.xlu0 %v453, 120
        %v463 = vpop.permute.xlu0 %462
        %s465 = scalar_lea.vmem %s333, 4 [#allocation7]
        %466 = vst.msk [vmem:[%s465] sm:$0xf] %vm449, %v463
        %467 = vrot.lane.b32.xlu0 %v453, 88
        %v468 = vpop.permute.xlu0 %467
        %s470 = scalar_lea.vmem %s340, 4 [#allocation8]
        %471 = vst.msk [vmem:[%s470] sm:$0xf] %vm449, %v468
        %472 = vrot.lane.b32.xlu0 %v453, 56
        %v473 = vpop.permute.xlu0 %472
        %s475 = scalar_lea.vmem %s347, 4 [#allocation10]
        %476 = vst.msk [vmem:[%s475] sm:$0xf] %vm449, %v473
        %477 = vrot.lane.b32.xlu0 %v453, 112
        %v478 = vpop.permute.xlu0 %477
        %s480 = scalar_lea.vmem %s333, 8 [#allocation7]
        %481 = vst.msk [vmem:[%s480] sm:$0xf] %vm449, %v478
        %482 = vrot.lane.b32.xlu0 %v453, 80
        %v483 = vpop.permute.xlu0 %482
        %s485 = scalar_lea.vmem %s340, 8 [#allocation8]
        %486 = vst.msk [vmem:[%s485] sm:$0xf] %vm449, %v483
        %487 = vrot.lane.b32.xlu0 %v453, 48
        %v488 = vpop.permute.xlu0 %487
        %s490 = scalar_lea.vmem %s347, 8 [#allocation10]
        %491 = vst.msk [vmem:[%s490] sm:$0xf] %vm449, %v488
        %492 = vrot.lane.b32.xlu0 %v453, 104
        %v493 = vpop.permute.xlu0 %492
        %s495 = scalar_lea.vmem %s333, 12 [#allocation7]
        %496 = vst.msk [vmem:[%s495] sm:$0xf] %vm449, %v493
        %497 = vrot.lane.b32.xlu0 %v453, 72
        %v498 = vpop.permute.xlu0 %497
        %s500 = scalar_lea.vmem %s340, 12 [#allocation8]
        %501 = vst.msk [vmem:[%s500] sm:$0xf] %vm449, %v498
        %502 = vrot.lane.b32.xlu0 %v453, 40
        %v503 = vpop.permute.xlu0 %502
        %s505 = scalar_lea.vmem %s347, 12 [#allocation10]
        %506 = vst.msk [vmem:[%s505] sm:$0xf] %vm449, %v503
        %s507 = sand.u32 %s163, 1
        %s508 = scalar_lea.sflag [#allocation4], %s507
        %s509 = sand.u32 %s163, 1
        %s510 = smul.addr %s509, 16
        %s511 = scalar_lea.vmem [#allocation7], %s510
        %s512 = sand.u32 %s29, 1
        %s513 = scalar_lea.sflag [#allocation9], %s512
        %s514 = sand.u32 %s191, 1
        %s515 = smul.addr %s514, 16
        %s516 = scalar_lea.vmem [#allocation8], %s515
        %s517 = sand.u32 %s29, 1
        %s518 = scalar_lea.sflag [#allocation9], %s517
        %s519 = sand.u32 %s219, 1
        %s520 = smul.addr %s519, 16
        %s521 = scalar_lea.vmem [#allocation10], %s520
        // Predicated region
        $region49: #{tpu_custom_call.1} parent=39 // pred_check
          %p522 = pneg %p173
        $region50: #{tpu_custom_call.1} parent=39 // pred_check_branch
          %524 = sbr.rel (%p522) target = $region52
        $region51: #{tpu_custom_call.1} parent=39 // pred_region
          %s526 = ssub.s32 256, 256
          %527 = vsyncadd %s508, %s526
          %s528 = smul.addr %s33, 4
          %s529 = sadd.s32 %s34, %s528
          %s530 = smul.addr %s529, 64
          %s531 = scalar_lea.hbm %s5, %s530
          %s532 = sshll.u32 %s511, 4
          %s533 = int_to_ptr.vmem [resolvable:$true] %s532
          %538 = dma.vmem_to_hbm [thread:$0]  %s533, 256, %s531, %s508, 64, 64, 4
        $region52: #{tpu_custom_call.1} parent=39 // pred_fallthru
          _
        // Predicated region
        $region53: #{tpu_custom_call.1} parent=39 // pred_check
          %p539 = pneg %p201
        $region54: #{tpu_custom_call.1} parent=39 // pred_check_branch
          %541 = sbr.rel (%p539) target = $region56
        $region55: #{tpu_custom_call.1} parent=39 // pred_region
          %s543 = ssub.s32 256, 256
          %544 = vsyncadd %s513, %s543
          %s545 = smul.addr %s33, 4
          %s546 = sadd.s32 %s34, %s545
          %s547 = smul.addr %s546, 64
          %s548 = scalar_lea.hbm %s6, %s547
          %s549 = sshll.u32 %s516, 4
          %s550 = int_to_ptr.vmem [resolvable:$true] %s549
          %555 = dma.vmem_to_hbm [thread:$0]  %s550, 256, %s548, %s513, 64, 64, 4
        $region56: #{tpu_custom_call.1} parent=39 // pred_fallthru
          _
        // Predicated region
        $region57: #{tpu_custom_call.1} parent=39 // pred_check
          %p556 = pneg %p229
        $region58: #{tpu_custom_call.1} parent=39 // pred_check_branch
          %558 = sbr.rel (%p556) target = $region60
        $region59: #{tpu_custom_call.1} parent=39 // pred_region
          %s560 = ssub.s32 256, 256
          %561 = vsyncadd %s518, %s560
          %s562 = smul.addr %s33, 4
          %s563 = sadd.s32 %s34, %s562
          %s564 = smul.addr %s563, 64
          %s565 = scalar_lea.hbm %s7, %s564
          %s566 = sshll.u32 %s521, 4
          %s567 = int_to_ptr.vmem [resolvable:$true] %s566
          %572 = dma.vmem_to_hbm [thread:$0]  %s567, 256, %s565, %s518, 64, 64, 4
        $region60: #{tpu_custom_call.1} parent=39 // pred_fallthru
          _
      $region40: #{tpu_custom_call.1} parent=5 // pred_fallthru
        _
      %p573 = scmp.le.s32.totalorder 2, %s24
      // Predicated region
      $region61: #{tpu_custom_call.1} parent=5 // pred_check
        %p574 = pneg %p573
      $region62: #{tpu_custom_call.1} parent=5 // pred_check_branch
        %576 = sbr.rel (%p574) target = $region64
      $region63: #{tpu_custom_call.1} parent=5 // pred_region
        %s577 = ssub.s32 %s24, 2
        // Predicated region
        $region65: #{tpu_custom_call.1} parent=63 // pred_check
          %p578 = pneg %p179
        $region66: #{tpu_custom_call.1} parent=63 // pred_check_branch
          %580 = sbr.rel (%p578) target = $region68
        $region67: #{tpu_custom_call.1} parent=63 // pred_region
          %s581 = sand.u32 %s164, 1
          %s582 = scalar_lea.sflag [#allocation4], %s581
          %s583 = sand.u32 %s164, 1
          %s584 = smul.addr %s583, 16
          %s585 = scalar_lea.vmem [#allocation7], %s584
          %586 = dma.done %s582, 256
        $region68: #{tpu_custom_call.1} parent=63 // pred_fallthru
          _
        // Predicated region
        $region69: #{tpu_custom_call.1} parent=63 // pred_check
          %p587 = pneg %p207
        $region70: #{tpu_custom_call.1} parent=63 // pred_check_branch
          %589 = sbr.rel (%p587) target = $region72
        $region71: #{tpu_custom_call.1} parent=63 // pred_region
          %s590 = sand.u32 %s30, 1
          %s591 = scalar_lea.sflag [#allocation9], %s590
          %s592 = sand.u32 %s192, 1
          %s593 = smul.addr %s592, 16
          %s594 = scalar_lea.vmem [#allocation8], %s593
          %595 = dma.done %s591, 256
        $region72: #{tpu_custom_call.1} parent=63 // pred_fallthru
          _
        // Predicated region
        $region73: #{tpu_custom_call.1} parent=63 // pred_check
          %p596 = pneg %p235
        $region74: #{tpu_custom_call.1} parent=63 // pred_check_branch
          %598 = sbr.rel (%p596) target = $region76
        $region75: #{tpu_custom_call.1} parent=63 // pred_region
          %s599 = sand.u32 %s30, 1
          %s600 = scalar_lea.sflag [#allocation9], %s599
          %s601 = sand.u32 %s220, 1
          %s602 = smul.addr %s601, 16
          %s603 = scalar_lea.vmem [#allocation10], %s602
          %604 = dma.done %s600, 256
        $region76: #{tpu_custom_call.1} parent=63 // pred_fallthru
          _
      $region64: #{tpu_custom_call.1} parent=5 // pred_fallthru
        _
    $region6: #{tpu_custom_call.1} parent=1 // loop_footer
      %s28 = sadd.s32 1, %s24
    $region7: #{tpu_custom_call.1} parent=1 // loop_footer_branch
      %23 = sbr.rel target = $region3
    $region8: #{tpu_custom_call.1} parent=1 // loop_exit
      _
    %605 = vsyncpa [#allocation3], 1
    %s606 = scalar_lea.sflag [#allocation3], 1
    %607 = vsyncpa %s606, 1
    %608 = vsyncpa [#allocation6], 1
    %609 = vsyncpa [#allocation4], 1
    %s610 = scalar_lea.sflag [#allocation4], 1
    %611 = vsyncpa %s610, 1
    %612 = vsyncpa [#allocation9], 1
    %s613 = scalar_lea.sflag [#allocation9], 1
    %614 = vsyncpa %s613, 1

</llo_original>
